<compile_context>
chip_gen: v5e
topology: v5e:2x2
jax: 0.10.0
libtpu: 0.0.40
codegen_flags: <defaults>
</compile_context>

<pallas_src>
import jax
import jax.numpy as jnp
from jax.experimental import pallas as pl
from jax.experimental.pallas import tpu as pltpu

D_FEATURE = 31              # env.d_feature (synthetic); input dim = d_feature + 1
D_IN = D_FEATURE + 1        # 32
H1, H2, OUT = 300, 400, 1   # logical (PyTorch) dims
H1P, H2P = 384, 512         # lane-padded hidden dims (multiples of 128)


def mlp_kernel(x_ref, w1_ref, b1_ref, w2_ref, b2_ref, w3_ref, b3_ref, o_ref):
    # fc1 + ReLU  (bf16 operands, f32 accumulation on the MXU)
    h1 = jnp.dot(x_ref[...], w1_ref[...], preferred_element_type=jnp.float32)
    h1 = jnp.maximum(h1 + b1_ref[...], 0.0)
    # fc2 + ReLU
    h2 = jnp.dot(h1.astype(jnp.bfloat16), w2_ref[...],
                 preferred_element_type=jnp.float32)
    h2 = jnp.maximum(h2 + b2_ref[...], 0.0)
    # fc3: output width 1 -> VPU/XLU lane reduction (the MXU is the saturated
    # unit; an N=1 matmul would waste >99% of its output columns).
    o = jnp.sum(h2 * w3_ref[...].astype(jnp.float32), axis=-1, keepdims=True)
    # Output is (TB, 1): lane-width-1 masked stores, but output bytes are tiny.
    o_ref[...] = (o + b3_ref[...]).astype(o_ref.dtype)


def prepare_params(params):
    """Zero-pad hidden dims to 384/512, pre-transpose fc3 to a (1, H2P) row,
    and cast weight matrices to bf16 (biases stay f32). Do this once."""
    w1, b1, w2, b2, w3, b3 = params
    w1p = jnp.pad(w1, ((0, 0), (0, H1P - H1))).astype(jnp.bfloat16)
    b1p = jnp.pad(b1, ((0, 0), (0, H1P - H1)))
    w2p = jnp.pad(w2, ((0, H1P - H1), (0, H2P - H2))).astype(jnp.bfloat16)
    b2p = jnp.pad(b2, ((0, 0), (0, H2P - H2)))
    w3p = jnp.pad(w3.T, ((0, 0), (0, H2P - H2))).astype(jnp.bfloat16)  # (1, H2P)
    return (w1p, b1p, w2p, b2p, w3p, b3)


def net_forward(x, padded_params):
    """x: (B, D_IN) float32. Returns (B, 1) float32."""
    w1, b1, w2, b2, w3, b3 = padded_params
    B = x.shape[0]

    # Batch tile: multiple of 8 sublanes, capped at 512 so the per-step VMEM
    # footprint (2x bf16 x tile + f32 h1/h2 temps + resident weights) stays a
    # few MiB -- safe on v5e/v6e (128 MiB) and v7x (64 MiB).
    TB = min(512, 8 * pl.cdiv(B, 8))
    n_tiles = pl.cdiv(B, TB)
    B_pad = n_tiles * TB

    xb = x.astype(jnp.bfloat16)
    if B_pad != B:
        xb = jnp.pad(xb, ((0, B_pad - B), (0, 0)))

    # Weights/biases: full-array blocks with constant index_map -> DMA'd once,
    # VMEM-resident across all batch tiles.
    resident = lambda a: pl.BlockSpec(a.shape, lambda i: (0,) * a.ndim)

    out = pl.pallas_call(
        mlp_kernel,
        out_shape=jax.ShapeDtypeStruct((B_pad, OUT), jnp.float32),
        grid_spec=pltpu.PrefetchScalarGridSpec(
            num_scalar_prefetch=0,
            grid=(n_tiles,),
            in_specs=[pl.BlockSpec((TB, D_IN), lambda i: (i, 0)),
                      resident(w1), resident(b1),
                      resident(w2), resident(b2),
                      resident(w3), resident(b3)],
            out_specs=pl.BlockSpec((TB, OUT), lambda i: (i, 0)),
        ),
        compiler_params=pltpu.CompilerParams(
            # Batch axis is independent -> shard across v7x's 2 TensorCores.
            dimension_semantics=("parallel",),
            vmem_limit_bytes=32 * 1024 * 1024,
        ),
    )(xb, w1, b1, w2, b2, w3, b3)
    return out[:B]


def init_params(key):
    """Deterministic synthetic params, PyTorch Linear init. Weights stored as
    (in, out) (i.e. torch's (out, in) pre-transposed); biases as (1, out)."""
    ks = jax.random.split(key, 6)

    def lin(kw, kb, fan_in, fan_out):
        bound = 1.0 / jnp.sqrt(fan_in)
        w = jax.random.uniform(kw, (fan_in, fan_out), jnp.float32, -bound, bound)
        b = jax.random.uniform(kb, (1, fan_out), jnp.float32, -bound, bound)
        return w, b

    w1, b1 = lin(ks[0], ks[1], D_IN, H1)
    w2, b2 = lin(ks[2], ks[3], H1, H2)
    w3, b3 = lin(ks[4], ks[5], H2, OUT)
    return (w1, b1, w2, b2, w3, b3)


def net_forward_ref(x, params):
    w1, b1, w2, b2, w3, b3 = params
    h = jnp.maximum(x @ w1 + b1, 0.0)
    h = jnp.maximum(h @ w2 + b2, 0.0)
    return h @ w3 + b3


if __name__ == "__main__":
    key = jax.random.PRNGKey(0)
    kx, kp = jax.random.split(key)
    B = 8
    x = jax.random.normal(kx, (B, D_IN), jnp.float32)
    params = init_params(kp)
    padded_params = prepare_params(params)

    y = net_forward(x, padded_params)
    jax.block_until_ready(y)

    y_ref = net_forward_ref(x, params)   # full f32 reference
    assert y.shape == (B, OUT)
    # bf16 operands (f32 accumulation) -> compare loosely against the f32 ref.
    err = float(jnp.max(jnp.abs(y - y_ref)))
    assert jnp.allclose(y, y_ref, atol=2e-2, rtol=2e-2), f"max abs err {err}"
    print("KERNEL_OK")
</pallas_src>

<mosaic_0001>
module attributes {stable_mosaic.version = 11 : i64} {
  func.func @mlp_kernel(%arg0: i32, %arg1: memref<8x32xbf16, #tpu.memory_space<vmem>>, %arg2: memref<32x384xbf16, #tpu.memory_space<vmem>>, %arg3: memref<1x384xf32, #tpu.memory_space<vmem>>, %arg4: memref<384x512xbf16, #tpu.memory_space<vmem>>, %arg5: memref<1x512xf32, #tpu.memory_space<vmem>>, %arg6: memref<1x512xbf16, #tpu.memory_space<vmem>>, %arg7: memref<1x1xf32, #tpu.memory_space<vmem>>, %arg8: memref<8x1xf32, #tpu.memory_space<vmem>>) attributes {dimension_semantics = [#tpu.dimension_semantics<parallel>], iteration_bounds = array<i64: 1>, scalar_prefetch = 0 : i64, scratch_operands = 0 : i64, tpu.core_type = #tpu.core_type<tc>, window_params = [{transform_indices = @transform_0, window_bounds = array<i64: 8, 32>}, {pipeline_mode = #tpu.pipeline_mode<synchronous>, transform_indices = @transform_1, window_bounds = array<i64: 32, 384>}, {pipeline_mode = #tpu.pipeline_mode<synchronous>, transform_indices = @transform_2, window_bounds = array<i64: 1, 384>}, {pipeline_mode = #tpu.pipeline_mode<synchronous>, transform_indices = @transform_3, window_bounds = array<i64: 384, 512>}, {pipeline_mode = #tpu.pipeline_mode<synchronous>, transform_indices = @transform_4, window_bounds = array<i64: 1, 512>}, {pipeline_mode = #tpu.pipeline_mode<synchronous>, transform_indices = @transform_5, window_bounds = array<i64: 1, 512>}, {pipeline_mode = #tpu.pipeline_mode<synchronous>, transform_indices = @transform_6, window_bounds = array<i64: 1, 1>}, {transform_indices = @transform_7, window_bounds = array<i64: 8, 1>}]} {
    %c0 = arith.constant 0 : index
    %c0_0 = arith.constant 0 : index
    %0 = vector.load %arg1[%c0, %c0_0] : memref<8x32xbf16, #tpu.memory_space<vmem>>, vector<8x32xbf16>
    %c0_1 = arith.constant 0 : index
    %c0_2 = arith.constant 0 : index
    %1 = vector.load %arg2[%c0_1, %c0_2] : memref<32x384xbf16, #tpu.memory_space<vmem>>, vector<32x384xbf16>
    %cst = arith.constant dense<0.000000e+00> : vector<8x384xf32>
    %2 = tpu.matmul %0, %1, %cst {dimension_numbers = #tpu.dot_dimension_numbers<[1], [0], [0], [1], [0, 0, 1, 1], [], []>} : vector<8x32xbf16>, vector<32x384xbf16>, vector<8x384xf32> -> vector<8x384xf32>
    %c0_3 = arith.constant 0 : index
    %c0_4 = arith.constant 0 : index
    %3 = vector.load %arg3[%c0_3, %c0_4] : memref<1x384xf32, #tpu.memory_space<vmem>>, vector<1x384xf32>
    %4 = vector.broadcast %3 : vector<1x384xf32> to vector<8x384xf32>
    %5 = arith.addf %2, %4 : vector<8x384xf32>
    %cst_5 = arith.constant 0.000000e+00 : f32
    %6 = vector.broadcast %cst_5 : f32 to vector<8x384xf32>
    %7 = arith.maximumf %5, %6 : vector<8x384xf32>
    %8 = arith.truncf %7 : vector<8x384xf32> to vector<8x384xbf16>
    %c0_6 = arith.constant 0 : index
    %c0_7 = arith.constant 0 : index
    %9 = vector.load %arg4[%c0_6, %c0_7] : memref<384x512xbf16, #tpu.memory_space<vmem>>, vector<384x512xbf16>
    %cst_8 = arith.constant dense<0.000000e+00> : vector<8x512xf32>
    %10 = tpu.matmul %8, %9, %cst_8 {dimension_numbers = #tpu.dot_dimension_numbers<[1], [0], [0], [1], [0, 0, 1, 1], [], []>} : vector<8x384xbf16>, vector<384x512xbf16>, vector<8x512xf32> -> vector<8x512xf32>
    %c0_9 = arith.constant 0 : index
    %c0_10 = arith.constant 0 : index
    %11 = vector.load %arg5[%c0_9, %c0_10] : memref<1x512xf32, #tpu.memory_space<vmem>>, vector<1x512xf32>
    %12 = vector.broadcast %11 : vector<1x512xf32> to vector<8x512xf32>
    %13 = arith.addf %10, %12 : vector<8x512xf32>
    %cst_11 = arith.constant 0.000000e+00 : f32
    %14 = vector.broadcast %cst_11 : f32 to vector<8x512xf32>
    %15 = arith.maximumf %13, %14 : vector<8x512xf32>
    %c0_12 = arith.constant 0 : index
    %c0_13 = arith.constant 0 : index
    %16 = vector.load %arg6[%c0_12, %c0_13] : memref<1x512xbf16, #tpu.memory_space<vmem>>, vector<1x512xbf16>
    %17 = arith.extf %16 : vector<1x512xbf16> to vector<1x512xf32>
    %18 = vector.broadcast %17 : vector<1x512xf32> to vector<8x512xf32>
    %19 = arith.mulf %15, %18 : vector<8x512xf32>
    %cst_14 = arith.constant dense<0.000000e+00> : vector<8xf32>
    %20 = vector.multi_reduction <add>, %19, %cst_14 [1] : vector<8x512xf32> to vector<8xf32>
    %21 = vector.shape_cast %20 : vector<8xf32> to vector<8x1xf32>
    %c0_15 = arith.constant 0 : index
    %c0_16 = arith.constant 0 : index
    %22 = vector.load %arg7[%c0_15, %c0_16] : memref<1x1xf32, #tpu.memory_space<vmem>>, vector<1x1xf32>
    %23 = vector.broadcast %22 : vector<1x1xf32> to vector<8x1xf32>
    %24 = arith.addf %21, %23 : vector<8x1xf32>
    %c0_17 = arith.constant 0 : index
    %c0_18 = arith.constant 0 : index
    %25 = vector.load %arg8[%c0_17, %c0_18] : memref<8x1xf32, #tpu.memory_space<vmem>>, vector<8x1xf32>
    tpu.vector_store %arg8[%c0_17, %c0_18], %24 {strides = array<i32>} : memref<8x1xf32, #tpu.memory_space<vmem>>, vector<8x1xf32>,
    return
  }
  func.func @transform_0(%arg0: i32) -> (i32, i32) {
    %c0_i32 = arith.constant 0 : i32
    %c0_i32_0 = arith.constant 0 : i32
    return %arg0, %c0_i32 : i32, i32
  }
  func.func @transform_1(%arg0: i32) -> (i32, i32) {
    %c0_i32 = arith.constant 0 : i32
    %c0_i32_0 = arith.constant 0 : i32
    %c0_i32_1 = arith.constant 0 : i32
    return %c0_i32, %c0_i32_0 : i32, i32
  }
  func.func @transform_2(%arg0: i32) -> (i32, i32) {
    %c0_i32 = arith.constant 0 : i32
    %c0_i32_0 = arith.constant 0 : i32
    %c0_i32_1 = arith.constant 0 : i32
    return %c0_i32, %c0_i32_0 : i32, i32
  }
  func.func @transform_3(%arg0: i32) -> (i32, i32) {
    %c0_i32 = arith.constant 0 : i32
    %c0_i32_0 = arith.constant 0 : i32
    %c0_i32_1 = arith.constant 0 : i32
    return %c0_i32, %c0_i32_0 : i32, i32
  }
  func.func @transform_4(%arg0: i32) -> (i32, i32) {
    %c0_i32 = arith.constant 0 : i32
    %c0_i32_0 = arith.constant 0 : i32
    %c0_i32_1 = arith.constant 0 : i32
    return %c0_i32, %c0_i32_0 : i32, i32
  }
  func.func @transform_5(%arg0: i32) -> (i32, i32) {
    %c0_i32 = arith.constant 0 : i32
    %c0_i32_0 = arith.constant 0 : i32
    %c0_i32_1 = arith.constant 0 : i32
    return %c0_i32, %c0_i32_0 : i32, i32
  }
  func.func @transform_6(%arg0: i32) -> (i32, i32) {
    %c0_i32 = arith.constant 0 : i32
    %c0_i32_0 = arith.constant 0 : i32
    %c0_i32_1 = arith.constant 0 : i32
    return %c0_i32, %c0_i32_0 : i32, i32
  }
  func.func @transform_7(%arg0: i32) -> (i32, i32) {
    %c0_i32 = arith.constant 0 : i32
    %c0_i32_0 = arith.constant 0 : i32
    return %arg0, %c0_i32 : i32, i32
  }
}

</mosaic_0001>

<llo_original>
// kernel: tpu_custom_call.1
$region0: #{tpu_custom_call.1}
  #allocation0 [shape = 'u32[]', space=smem, size = 0x4, offset = 0x4, fixed_abs, tag = 'smem constant byte address 0x4 - core index']
  #allocation1 [shape = 'u32[72,128]{1,0:T(1,128)}', space=vmem, size = 0x9000, scoped, tag = 'internal scratch']
  #allocation2 [shape = 'f32[1,1]{1,0:T(1,128)S(1)}', space=vmem, size = 0x200, scoped, tag = 'scoped memory for tpu_custom_call.1']
  %s0 = inlined_call_operand.hbm [shape: bf16[8,32], index: 0, kind: input, shape index: {}]
  %s1 = inlined_call_operand.hbm [shape: bf16[32,384], index: 1, kind: input, shape index: {}]
  %s2 = inlined_call_operand.hbm [shape: f32[1,384], index: 2, kind: input, shape index: {}]
  %s3 = inlined_call_operand.hbm [shape: bf16[384,512], index: 3, kind: input, shape index: {}]
  %s4 = inlined_call_operand.vmem [shape: f32[1,512], index: 4, kind: input, shape index: {}]
  %s5 = inlined_call_operand.hbm [shape: bf16[1,512], index: 5, kind: input, shape index: {}]
  %s6 = inlined_call_operand.<no memory space> [shape: f32[1,1], index: 6, kind: input, shape index: {}]
  %s7 = inlined_call_operand.vmem [shape: f32[8,1], index: 7, kind: output, shape index: {}]
  %s8 = sld [smem:[#allocation0]]
  $region58: #{tpu_custom_call.1} parent=0
    _
  %s10 = ssub.s32 1, %s8
  %s11 = scalar_select 0, %s10, %s8
  %v12 = vstv %s6
  %13 = vst [vmem:[#allocation2] sm:$0x1] %v12
  $region1: #{tpu_custom_call.1} parent=0
    #allocation3 [shape = 'u8[2048]{0}', space=vmem, size = 0x800, scoped, tag = 'input window, operand 0, single buffered']
    #allocation4 [shape = 's32[1]{0}', space=sflag, size = 0x4, scoped, tag = 'scoped memory for tpu_custom_call.1']
    #allocation5 [shape = 'u8[24576]{0}', space=vmem, size = 0x6000, scoped, tag = 'input window, operand 1, single buffered']
    #allocation6 [shape = 's32[1]{0}', space=sflag, size = 0x4, scoped, tag = 'scoped memory for tpu_custom_call.1']
    #allocation7 [shape = 'u8[1536]{0}', space=vmem, size = 0x800, scoped, tag = 'input window, operand 2, single buffered']
    #allocation8 [shape = 'u8[393216]{0}', space=vmem, size = 0x60000, scoped, tag = 'input window, operand 3, single buffered']
    #allocation9 [shape = 's32[1]{0}', space=sflag, size = 0x4, scoped, tag = 'scoped memory for tpu_custom_call.1']
    #allocation10 [shape = 'u8[2048]{0}', space=vmem, size = 0x800, scoped, tag = 'input window, operand 5, single buffered']
    %14 = vsyncpa [#allocation4], 0
    %15 = vsyncpa [#allocation6], 0
    %16 = vsyncpa [#allocation9], 0
    // Predicated region
    $region2: #{tpu_custom_call.1} parent=1 // pred_check
      _
    $region3: #{tpu_custom_call.1} parent=1 // pred_check_branch
      %18 = sbr.rel (0) target = $region5
    $region4: #{tpu_custom_call.1} parent=1 // pred_region
      %20 = vsyncadd [#allocation4], 0
      %s22 = sshll.u32 %s0, 4
      %s23 = int_to_ptr.hbm [resolvable:$true] %s22
      %s24 = sshll.u32 [#allocation3], 4
      %s25 = int_to_ptr.vmem [resolvable:$true] %s24
      %27 = dma.hbm_to_vmem [thread:$0]  %s23, 64, %s25, [#allocation4]
    $region5: #{tpu_custom_call.1} parent=1 // pred_fallthru
      _
    // Predicated region
    $region6: #{tpu_custom_call.1} parent=1 // pred_check
      _
    $region7: #{tpu_custom_call.1} parent=1 // pred_check_branch
      %29 = sbr.rel (0) target = $region9
    $region8: #{tpu_custom_call.1} parent=1 // pred_region
      %31 = vsyncadd [#allocation6], 0
      %s32 = sshll.u32 %s1, 4
      %s33 = int_to_ptr.hbm [resolvable:$true] %s32
      %s34 = sshll.u32 [#allocation5], 4
      %s35 = int_to_ptr.vmem [resolvable:$true] %s34
      %40 = dma.hbm_to_vmem [thread:$0]  %s33, 768, %s35, [#allocation6], 192, 192, 12
    $region9: #{tpu_custom_call.1} parent=1 // pred_fallthru
      _
    // Predicated region
    $region10: #{tpu_custom_call.1} parent=1 // pred_check
      _
    $region11: #{tpu_custom_call.1} parent=1 // pred_check_branch
      %42 = sbr.rel (0) target = $region13
    $region12: #{tpu_custom_call.1} parent=1 // pred_region
      %44 = vsyncadd [#allocation6], 0
      %s46 = sshll.u32 %s2, 4
      %s47 = int_to_ptr.hbm [resolvable:$true] %s46
      %s48 = sshll.u32 [#allocation7], 4
      %s49 = int_to_ptr.vmem [resolvable:$true] %s48
      %51 = dma.hbm_to_vmem [thread:$0]  %s47, 48, %s49, [#allocation6]
    $region13: #{tpu_custom_call.1} parent=1 // pred_fallthru
      _
    // Predicated region
    $region14: #{tpu_custom_call.1} parent=1 // pred_check
      _
    $region15: #{tpu_custom_call.1} parent=1 // pred_check_branch
      %53 = sbr.rel (0) target = $region17
    $region16: #{tpu_custom_call.1} parent=1 // pred_region
      %55 = vsyncadd [#allocation9], 0
      %s56 = sshll.u32 %s3, 4
      %s57 = int_to_ptr.hbm [resolvable:$true] %s56
      %s58 = sshll.u32 [#allocation8], 4
      %s59 = int_to_ptr.vmem [resolvable:$true] %s58
      %64 = dma.hbm_to_vmem [thread:$0]  %s57, 12288, %s59, [#allocation9], 256, 256, 16
    $region17: #{tpu_custom_call.1} parent=1 // pred_fallthru
      _
    // Predicated region
    $region18: #{tpu_custom_call.1} parent=1 // pred_check
      _
    $region19: #{tpu_custom_call.1} parent=1 // pred_check_branch
      %66 = sbr.rel (0) target = $region21
    $region20: #{tpu_custom_call.1} parent=1 // pred_region
      _
    $region21: #{tpu_custom_call.1} parent=1 // pred_fallthru
      _
    // Predicated region
    $region22: #{tpu_custom_call.1} parent=1 // pred_check
      _
    $region23: #{tpu_custom_call.1} parent=1 // pred_check_branch
      %68 = sbr.rel (0) target = $region25
    $region24: #{tpu_custom_call.1} parent=1 // pred_region
      %70 = vsyncadd [#allocation9], 0
      %s72 = sshll.u32 %s5, 4
      %s73 = int_to_ptr.hbm [resolvable:$true] %s72
      %s74 = sshll.u32 [#allocation10], 4
      %s75 = int_to_ptr.vmem [resolvable:$true] %s74
      %77 = dma.hbm_to_vmem [thread:$0]  %s73, 64, %s75, [#allocation9]
    $region25: #{tpu_custom_call.1} parent=1 // pred_fallthru
      _
    // Predicated region
    $region26: #{tpu_custom_call.1} parent=1 // pred_check
      _
    $region27: #{tpu_custom_call.1} parent=1 // pred_check_branch
      %79 = sbr.rel (0) target = $region29
    $region28: #{tpu_custom_call.1} parent=1 // pred_region
      _
    $region29: #{tpu_custom_call.1} parent=1 // pred_fallthru
      _
    // Predicated region
    $region30: #{tpu_custom_call.1} parent=1 // pred_check
      _
    $region31: #{tpu_custom_call.1} parent=1 // pred_check_branch
      %81 = sbr.rel (0) target = $region33
    $region32: #{tpu_custom_call.1} parent=1 // pred_region
      %83 = dma.done [#allocation4], 64
    $region33: #{tpu_custom_call.1} parent=1 // pred_fallthru
      _
    // Predicated region
    $region34: #{tpu_custom_call.1} parent=1 // pred_check
      _
    $region35: #{tpu_custom_call.1} parent=1 // pred_check_branch
      %85 = sbr.rel (0) target = $region37
    $region36: #{tpu_custom_call.1} parent=1 // pred_region
      %87 = dma.done [#allocation6], 768
    $region37: #{tpu_custom_call.1} parent=1 // pred_fallthru
      _
    // Predicated region
    $region38: #{tpu_custom_call.1} parent=1 // pred_check
      _
    $region39: #{tpu_custom_call.1} parent=1 // pred_check_branch
      %89 = sbr.rel (0) target = $region41
    $region40: #{tpu_custom_call.1} parent=1 // pred_region
      %91 = dma.done [#allocation6], 48
    $region41: #{tpu_custom_call.1} parent=1 // pred_fallthru
      _
    // Predicated region
    $region42: #{tpu_custom_call.1} parent=1 // pred_check
      _
    $region43: #{tpu_custom_call.1} parent=1 // pred_check_branch
      %93 = sbr.rel (0) target = $region45
    $region44: #{tpu_custom_call.1} parent=1 // pred_region
      %95 = dma.done [#allocation9], 12288
    $region45: #{tpu_custom_call.1} parent=1 // pred_fallthru
      _
    // Predicated region
    $region46: #{tpu_custom_call.1} parent=1 // pred_check
      _
    $region47: #{tpu_custom_call.1} parent=1 // pred_check_branch
      %97 = sbr.rel (0) target = $region49
    $region48: #{tpu_custom_call.1} parent=1 // pred_region
      %99 = dma.done [#allocation9], 64
    $region49: #{tpu_custom_call.1} parent=1 // pred_fallthru
      _
    %v101 = vld [vmem:[#allocation3] sm:$0xf]
    %v102 = vld [vmem:[#allocation5] sm:$0xff]
    %v103 = vld [vmem:[#allocation5 + $0x8] sm:$0xf]
    %v104 = vld [vmem:[#allocation5 + $0xc] sm:$0xff]
    %v105 = vld [vmem:[#allocation5 + $0x14] sm:$0xf]
    %v106 = vld [vmem:[#allocation5 + $0x18] sm:$0xff]
    %v107 = vld [vmem:[#allocation5 + $0x20] sm:$0xf]
    %v108 = vld [vmem:[#allocation5 + $0x24] sm:$0xff]
    %v109 = vld [vmem:[#allocation5 + $0x2c] sm:$0xf]
    %v110 = vld [vmem:[#allocation7] sm:$0x7]
    %v112 = vperm.slane %v110, 0
    %v113 = vperm.slane %v110, 1
    %v114 = vperm.slane %v110, 2
    %v126 = vunpack.c.l.b16 %v102
    %v127 = vunpack.c.h.b16 %v102
    %v128 = vunpack.c.l.b16 %v103
    %v129 = vunpack.c.l.b16 %v104
    %v130 = vunpack.c.h.b16 %v104
    %v131 = vunpack.c.l.b16 %v105
    %v132 = vunpack.c.l.b16 %v106
    %v133 = vunpack.c.h.b16 %v106
    %v134 = vunpack.c.l.b16 %v107
    %v135 = vunpack.c.l.b16 %v108
    %v136 = vunpack.c.h.b16 %v108
    %v137 = vunpack.c.l.b16 %v109
    %v138 = vpack.c.b16 %v129, %v126
    %v139 = vpack.c.b16 %v130, %v127
    %v140 = vpack.c.b16 %v131, %v128
    %v141 = vpack.c.b16 %v135, %v132
    %v142 = vpack.c.b16 %v136, %v133
    %v143 = vpack.c.b16 %v137, %v134
    %vm150 = vcmask 261120
    %v152 = vsel %vm150, %v101, 0
    %154 = vmatpush.bf16.msra.mxu0 0
    %155 = vmatpush.bf16.msra.mxu0 0
    %156 = vmatpush.bf16.msra.mxu0 0
    %157 = vmatpush.bf16.msra.mxu0 0
    %158 = vmatpush.bf16.msra.mxu0 0
    %159 = vmatpush.bf16.msra.mxu0 0
    %160 = vmatpush.bf16.msra.mxu0 %v141
    %161 = vmatpush.bf16.msra.mxu0 %v138
    %162 = vmatmul.bf16.gmra.mxu0 %v152
    %v163 = vpop.f32.mrf.mxu0
    %v164 = vadd.f32 %v112, %v163
    %v165 = vpop.f32.mrf.mxu0
    %166 = vdwg.mxu0
    %167 = vmatpush.bf16.msra.mxu0 0
    %168 = vmatpush.bf16.msra.mxu0 0
    %169 = vmatpush.bf16.msra.mxu0 0
    %170 = vmatpush.bf16.msra.mxu0 0
    %171 = vmatpush.bf16.msra.mxu0 0
    %172 = vmatpush.bf16.msra.mxu0 0
    %173 = vmatpush.bf16.msra.mxu0 %v142
    %174 = vmatpush.bf16.msra.mxu0 %v139
    %175 = vmatmul.bf16.gmra.mxu0 %v152
    %v176 = vpop.f32.mrf.mxu0
    %v177 = vadd.f32 %v113, %v176
    %v178 = vpop.f32.mrf.mxu0
    %179 = vdwg.mxu0
    %180 = vmatpush.bf16.msra.mxu0 0
    %181 = vmatpush.bf16.msra.mxu0 0
    %182 = vmatpush.bf16.msra.mxu0 0
    %183 = vmatpush.bf16.msra.mxu0 0
    %184 = vmatpush.bf16.msra.mxu0 0
    %185 = vmatpush.bf16.msra.mxu0 0
    %186 = vmatpush.bf16.msra.mxu0 %v143
    %187 = vmatpush.bf16.msra.mxu0 %v140
    %188 = vmatmul.bf16.gmra.mxu0 %v152
    %v189 = vpop.f32.mrf.mxu0
    %v190 = vadd.f32 %v114, %v189
    %v191 = vpop.f32.mrf.mxu0
    %192 = vdwg.mxu0
    %v193 = vmax.f32 %v164, 0.0
    %v194 = vmax.f32 %v177, 0.0
    %v195 = vmax.f32 %v190, 0.0
    %v196 = vpack.c.bf16 %v193, %v193
    %v197 = vpack.c.bf16 %v194, %v194
    %v198 = vpack.c.bf16 %v195, %v195
    %v199 = vld [vmem:[#allocation8] sm:$0xff]
    %v200 = vld [vmem:[#allocation8 + $0x8] sm:$0xff]
    %v201 = vld [vmem:[#allocation8 + $0x10] sm:$0xff]
    %v202 = vld [vmem:[#allocation8 + $0x18] sm:$0xff]
    %v203 = vld [vmem:[#allocation8 + $0x20] sm:$0xff]
    %v204 = vld [vmem:[#allocation8 + $0x28] sm:$0xff]
    %v205 = vld [vmem:[#allocation8 + $0x30] sm:$0xff]
    %v206 = vld [vmem:[#allocation8 + $0x38] sm:$0xff]
    %v207 = vld [vmem:[#allocation8 + $0x40] sm:$0xff]
    %v208 = vld [vmem:[#allocation8 + $0x48] sm:$0xff]
    %v209 = vld [vmem:[#allocation8 + $0x50] sm:$0xff]
    %v210 = vld [vmem:[#allocation8 + $0x58] sm:$0xff]
    %v211 = vld [vmem:[#allocation8 + $0x60] sm:$0xff]
    %v212 = vld [vmem:[#allocation8 + $0x68] sm:$0xff]
    %v213 = vld [vmem:[#allocation8 + $0x70] sm:$0xff]
    %v214 = vld [vmem:[#allocation8 + $0x78] sm:$0xff]
    %v215 = vld [vmem:[#allocation8 + $0x80] sm:$0xff]
    %v216 = vld [vmem:[#allocation8 + $0x88] sm:$0xff]
    %v217 = vld [vmem:[#allocation8 + $0x90] sm:$0xff]
    %v218 = vld [vmem:[#allocation8 + $0x98] sm:$0xff]
    %v219 = vld [vmem:[#allocation8 + $0xa0] sm:$0xff]
    %v220 = vld [vmem:[#allocation8 + $0xa8] sm:$0xff]
    %v221 = vld [vmem:[#allocation8 + $0xb0] sm:$0xff]
    %v222 = vld [vmem:[#allocation8 + $0xb8] sm:$0xff]
    %v223 = vld [vmem:[#allocation8 + $0xc0] sm:$0xff]
    %v224 = vld [vmem:[#allocation8 + $0xc8] sm:$0xff]
    %v225 = vld [vmem:[#allocation8 + $0xd0] sm:$0xff]
    %v226 = vld [vmem:[#allocation8 + $0xd8] sm:$0xff]
    %v227 = vld [vmem:[#allocation8 + $0xe0] sm:$0xff]
    %v228 = vld [vmem:[#allocation8 + $0xe8] sm:$0xff]
    %v229 = vld [vmem:[#allocation8 + $0xf0] sm:$0xff]
    %v230 = vld [vmem:[#allocation8 + $0xf8] sm:$0xff]
    %v231 = vld [vmem:[#allocation8 + $0x100] sm:$0xff]
    %v232 = vld [vmem:[#allocation8 + $0x108] sm:$0xff]
    %v233 = vld [vmem:[#allocation8 + $0x110] sm:$0xff]
    %v234 = vld [vmem:[#allocation8 + $0x118] sm:$0xff]
    %v235 = vld [vmem:[#allocation8 + $0x120] sm:$0xff]
    %v236 = vld [vmem:[#allocation8 + $0x128] sm:$0xff]
    %v237 = vld [vmem:[#allocation8 + $0x130] sm:$0xff]
    %v238 = vld [vmem:[#allocation8 + $0x138] sm:$0xff]
    %v239 = vld [vmem:[#allocation8 + $0x140] sm:$0xff]
    %v240 = vld [vmem:[#allocation8 + $0x148] sm:$0xff]
    %v241 = vld [vmem:[#allocation8 + $0x150] sm:$0xff]
    %v242 = vld [vmem:[#allocation8 + $0x158] sm:$0xff]
    %v243 = vld [vmem:[#allocation8 + $0x160] sm:$0xff]
    %v244 = vld [vmem:[#allocation8 + $0x168] sm:$0xff]
    %v245 = vld [vmem:[#allocation8 + $0x170] sm:$0xff]
    %v246 = vld [vmem:[#allocation8 + $0x178] sm:$0xff]
    %v247 = vld [vmem:[#allocation8 + $0x180] sm:$0xff]
    %v248 = vld [vmem:[#allocation8 + $0x188] sm:$0xff]
    %v249 = vld [vmem:[#allocation8 + $0x190] sm:$0xff]
    %v250 = vld [vmem:[#allocation8 + $0x198] sm:$0xff]
    %v251 = vld [vmem:[#allocation8 + $0x1a0] sm:$0xff]
    %v252 = vld [vmem:[#allocation8 + $0x1a8] sm:$0xff]
    %v253 = vld [vmem:[#allocation8 + $0x1b0] sm:$0xff]
    %v254 = vld [vmem:[#allocation8 + $0x1b8] sm:$0xff]
    %v255 = vld [vmem:[#allocation8 + $0x1c0] sm:$0xff]
    %v256 = vld [vmem:[#allocation8 + $0x1c8] sm:$0xff]
    %v257 = vld [vmem:[#allocation8 + $0x1d0] sm:$0xff]
    %v258 = vld [vmem:[#allocation8 + $0x1d8] sm:$0xff]
    %v259 = vld [vmem:[#allocation8 + $0x1e0] sm:$0xff]
    %v260 = vld [vmem:[#allocation8 + $0x1e8] sm:$0xff]
    %v261 = vld [vmem:[#allocation8 + $0x1f0] sm:$0xff]
    %v262 = vld [vmem:[#allocation8 + $0x1f8] sm:$0xff]
    %v263 = vld [vmem:[#allocation8 + $0x200] sm:$0xff]
    %v264 = vld [vmem:[#allocation8 + $0x208] sm:$0xff]
    %v265 = vld [vmem:[#allocation8 + $0x210] sm:$0xff]
    %v266 = vld [vmem:[#allocation8 + $0x218] sm:$0xff]
    %v267 = vld [vmem:[#allocation8 + $0x220] sm:$0xff]
    %v268 = vld [vmem:[#allocation8 + $0x228] sm:$0xff]
    %v269 = vld [vmem:[#allocation8 + $0x230] sm:$0xff]
    %v270 = vld [vmem:[#allocation8 + $0x238] sm:$0xff]
    %v271 = vld [vmem:[#allocation8 + $0x240] sm:$0xff]
    %v272 = vld [vmem:[#allocation8 + $0x248] sm:$0xff]
    %v273 = vld [vmem:[#allocation8 + $0x250] sm:$0xff]
    %v274 = vld [vmem:[#allocation8 + $0x258] sm:$0xff]
    %v275 = vld [vmem:[#allocation8 + $0x260] sm:$0xff]
    %v276 = vld [vmem:[#allocation8 + $0x268] sm:$0xff]
    %v277 = vld [vmem:[#allocation8 + $0x270] sm:$0xff]
    %v278 = vld [vmem:[#allocation8 + $0x278] sm:$0xff]
    %v279 = vld [vmem:[#allocation8 + $0x280] sm:$0xff]
    %v280 = vld [vmem:[#allocation8 + $0x288] sm:$0xff]
    %v281 = vld [vmem:[#allocation8 + $0x290] sm:$0xff]
    %v282 = vld [vmem:[#allocation8 + $0x298] sm:$0xff]
    %v283 = vld [vmem:[#allocation8 + $0x2a0] sm:$0xff]
    %v284 = vld [vmem:[#allocation8 + $0x2a8] sm:$0xff]
    %v285 = vld [vmem:[#allocation8 + $0x2b0] sm:$0xff]
    %v286 = vld [vmem:[#allocation8 + $0x2b8] sm:$0xff]
    %v287 = vld [vmem:[#allocation8 + $0x2c0] sm:$0xff]
    %v288 = vld [vmem:[#allocation8 + $0x2c8] sm:$0xff]
    %v289 = vld [vmem:[#allocation8 + $0x2d0] sm:$0xff]
    %v290 = vld [vmem:[#allocation8 + $0x2d8] sm:$0xff]
    %v291 = vld [vmem:[#allocation8 + $0x2e0] sm:$0xff]
    %v292 = vld [vmem:[#allocation8 + $0x2e8] sm:$0xff]
    %v293 = vld [vmem:[#allocation8 + $0x2f0] sm:$0xff]
    %v294 = vld [vmem:[#allocation8 + $0x2f8] sm:$0xff]
    %v295 = vld [vmem:[%s4] sm:$0xf]
    %v297 = vperm.slane %v295, 0
    %v298 = vperm.slane %v295, 1
    %v299 = vperm.slane %v295, 2
    %v300 = vperm.slane %v295, 3
    %v401 = vunpack.c.l.b16 %v199
    %v402 = vunpack.c.h.b16 %v199
    %v403 = vunpack.c.l.b16 %v200
    %v404 = vunpack.c.h.b16 %v200
    %v405 = vunpack.c.l.b16 %v201
    %v406 = vunpack.c.h.b16 %v201
    %v407 = vunpack.c.l.b16 %v202
    %v408 = vunpack.c.h.b16 %v202
    %v409 = vunpack.c.l.b16 %v203
    %v410 = vunpack.c.h.b16 %v203
    %v411 = vunpack.c.l.b16 %v204
    %v412 = vunpack.c.h.b16 %v204
    %v413 = vunpack.c.l.b16 %v205
    %v414 = vunpack.c.h.b16 %v205
    %v415 = vunpack.c.l.b16 %v206
    %v416 = vunpack.c.h.b16 %v206
    %v417 = vunpack.c.l.b16 %v207
    %v418 = vunpack.c.h.b16 %v207
    %v419 = vunpack.c.l.b16 %v208
    %v420 = vunpack.c.h.b16 %v208
    %v421 = vunpack.c.l.b16 %v209
    %v422 = vunpack.c.h.b16 %v209
    %v423 = vunpack.c.l.b16 %v210
    %v424 = vunpack.c.h.b16 %v210
    %v425 = vunpack.c.l.b16 %v211
    %v426 = vunpack.c.h.b16 %v211
    %v427 = vunpack.c.l.b16 %v212
    %v428 = vunpack.c.h.b16 %v212
    %v429 = vunpack.c.l.b16 %v213
    %v430 = vunpack.c.h.b16 %v213
    %v431 = vunpack.c.l.b16 %v214
    %v432 = vunpack.c.h.b16 %v214
    %v433 = vunpack.c.l.b16 %v215
    %v434 = vunpack.c.h.b16 %v215
    %v435 = vunpack.c.l.b16 %v216
    %v436 = vunpack.c.h.b16 %v216
    %v437 = vunpack.c.l.b16 %v217
    %v438 = vunpack.c.h.b16 %v217
    %v439 = vunpack.c.l.b16 %v218
    %v440 = vunpack.c.h.b16 %v218
    %v441 = vunpack.c.l.b16 %v219
    %v442 = vunpack.c.h.b16 %v219
    %v443 = vunpack.c.l.b16 %v220
    %v444 = vunpack.c.h.b16 %v220
    %v445 = vunpack.c.l.b16 %v221
    %v446 = vunpack.c.h.b16 %v221
    %v447 = vunpack.c.l.b16 %v222
    %v448 = vunpack.c.h.b16 %v222
    %v449 = vunpack.c.l.b16 %v223
    %v450 = vunpack.c.h.b16 %v223
    %v451 = vunpack.c.l.b16 %v224
    %v452 = vunpack.c.h.b16 %v224
    %v453 = vunpack.c.l.b16 %v225
    %v454 = vunpack.c.h.b16 %v225
    %v455 = vunpack.c.l.b16 %v226
    %v456 = vunpack.c.h.b16 %v226
    %v457 = vunpack.c.l.b16 %v227
    %v458 = vunpack.c.h.b16 %v227
    %v459 = vunpack.c.l.b16 %v228
    %v460 = vunpack.c.h.b16 %v228
    %v461 = vunpack.c.l.b16 %v229
    %v462 = vunpack.c.h.b16 %v229
    %v463 = vunpack.c.l.b16 %v230
    %v464 = vunpack.c.h.b16 %v230
    %v465 = vunpack.c.l.b16 %v231
    %v466 = vunpack.c.h.b16 %v231
    %v467 = vunpack.c.l.b16 %v232
    %v468 = vunpack.c.h.b16 %v232
    %v469 = vunpack.c.l.b16 %v233
    %v470 = vunpack.c.h.b16 %v233
    %v471 = vunpack.c.l.b16 %v234
    %v472 = vunpack.c.h.b16 %v234
    %v473 = vunpack.c.l.b16 %v235
    %v474 = vunpack.c.h.b16 %v235
    %v475 = vunpack.c.l.b16 %v236
    %v476 = vunpack.c.h.b16 %v236
    %v477 = vunpack.c.l.b16 %v237
    %v478 = vunpack.c.h.b16 %v237
    %v479 = vunpack.c.l.b16 %v238
    %v480 = vunpack.c.h.b16 %v238
    %v481 = vunpack.c.l.b16 %v239
    %v482 = vunpack.c.h.b16 %v239
    %v483 = vunpack.c.l.b16 %v240
    %v484 = vunpack.c.h.b16 %v240
    %v485 = vunpack.c.l.b16 %v241
    %v486 = vunpack.c.h.b16 %v241
    %v487 = vunpack.c.l.b16 %v242
    %v488 = vunpack.c.h.b16 %v242
    %v489 = vunpack.c.l.b16 %v243
    %v490 = vunpack.c.h.b16 %v243
    %v491 = vunpack.c.l.b16 %v244
    %v492 = vunpack.c.h.b16 %v244
    %v493 = vunpack.c.l.b16 %v245
    %v494 = vunpack.c.h.b16 %v245
    %v495 = vunpack.c.l.b16 %v246
    %v496 = vunpack.c.h.b16 %v246
    %v497 = vunpack.c.l.b16 %v247
    %v498 = vunpack.c.h.b16 %v247
    %v499 = vunpack.c.l.b16 %v248
    %v500 = vunpack.c.h.b16 %v248
    %v501 = vunpack.c.l.b16 %v249
    %v502 = vunpack.c.h.b16 %v249
    %v503 = vunpack.c.l.b16 %v250
    %v504 = vunpack.c.h.b16 %v250
    %v505 = vunpack.c.l.b16 %v251
    %v506 = vunpack.c.h.b16 %v251
    %v507 = vunpack.c.l.b16 %v252
    %v508 = vunpack.c.h.b16 %v252
    %v509 = vunpack.c.l.b16 %v253
    %v510 = vunpack.c.h.b16 %v253
    %v511 = vunpack.c.l.b16 %v254
    %v512 = vunpack.c.h.b16 %v254
    %v513 = vunpack.c.l.b16 %v255
    %v514 = vunpack.c.h.b16 %v255
    %v515 = vunpack.c.l.b16 %v256
    %v516 = vunpack.c.h.b16 %v256
    %v517 = vunpack.c.l.b16 %v257
    %v518 = vunpack.c.h.b16 %v257
    %v519 = vunpack.c.l.b16 %v258
    %v520 = vunpack.c.h.b16 %v258
    %v521 = vunpack.c.l.b16 %v259
    %v522 = vunpack.c.h.b16 %v259
    %v523 = vunpack.c.l.b16 %v260
    %v524 = vunpack.c.h.b16 %v260
    %v525 = vunpack.c.l.b16 %v261
    %v526 = vunpack.c.h.b16 %v261
    %v527 = vunpack.c.l.b16 %v262
    %v528 = vunpack.c.h.b16 %v262
    %v529 = vunpack.c.l.b16 %v263
    %v530 = vunpack.c.h.b16 %v263
    %v531 = vunpack.c.l.b16 %v264
    %v532 = vunpack.c.h.b16 %v264
    %v533 = vunpack.c.l.b16 %v265
    %v534 = vunpack.c.h.b16 %v265
    %v535 = vunpack.c.l.b16 %v266
    %v536 = vunpack.c.h.b16 %v266
    %v537 = vunpack.c.l.b16 %v267
    %v538 = vunpack.c.h.b16 %v267
    %v539 = vunpack.c.l.b16 %v268
    %v540 = vunpack.c.h.b16 %v268
    %v541 = vunpack.c.l.b16 %v269
    %v542 = vunpack.c.h.b16 %v269
    %v543 = vunpack.c.l.b16 %v270
    %v544 = vunpack.c.h.b16 %v270
    %v545 = vunpack.c.l.b16 %v271
    %v546 = vunpack.c.h.b16 %v271
    %v547 = vunpack.c.l.b16 %v272
    %v548 = vunpack.c.h.b16 %v272
    %v549 = vunpack.c.l.b16 %v273
    %v550 = vunpack.c.h.b16 %v273
    %v551 = vunpack.c.l.b16 %v274
    %v552 = vunpack.c.h.b16 %v274
    %v553 = vunpack.c.l.b16 %v275
    %v554 = vunpack.c.h.b16 %v275
    %v555 = vunpack.c.l.b16 %v276
    %v556 = vunpack.c.h.b16 %v276
    %v557 = vunpack.c.l.b16 %v277
    %v558 = vunpack.c.h.b16 %v277
    %v559 = vunpack.c.l.b16 %v278
    %v560 = vunpack.c.h.b16 %v278
    %v561 = vunpack.c.l.b16 %v279
    %v562 = vunpack.c.h.b16 %v279
    %v563 = vunpack.c.l.b16 %v280
    %v564 = vunpack.c.h.b16 %v280
    %v565 = vunpack.c.l.b16 %v281
    %v566 = vunpack.c.h.b16 %v281
    %v567 = vunpack.c.l.b16 %v282
    %v568 = vunpack.c.h.b16 %v282
    %v569 = vunpack.c.l.b16 %v283
    %v570 = vunpack.c.h.b16 %v283
    %v571 = vunpack.c.l.b16 %v284
    %v572 = vunpack.c.h.b16 %v284
    %v573 = vunpack.c.l.b16 %v285
    %v574 = vunpack.c.h.b16 %v285
    %v575 = vunpack.c.l.b16 %v286
    %v576 = vunpack.c.h.b16 %v286
    %v577 = vunpack.c.l.b16 %v287
    %v578 = vunpack.c.h.b16 %v287
    %v579 = vunpack.c.l.b16 %v288
    %v580 = vunpack.c.h.b16 %v288
    %v581 = vunpack.c.l.b16 %v289
    %v582 = vunpack.c.h.b16 %v289
    %v583 = vunpack.c.l.b16 %v290
    %v584 = vunpack.c.h.b16 %v290
    %v585 = vunpack.c.l.b16 %v291
    %v586 = vunpack.c.h.b16 %v291
    %v587 = vunpack.c.l.b16 %v292
    %v588 = vunpack.c.h.b16 %v292
    %v589 = vunpack.c.l.b16 %v293
    %v590 = vunpack.c.h.b16 %v293
    %v591 = vunpack.c.l.b16 %v294
    %v592 = vunpack.c.h.b16 %v294
    %v593 = vpack.c.b16 %v405, %v401
    %v594 = vpack.c.b16 %v406, %v402
    %v595 = vpack.c.b16 %v407, %v403
    %v596 = vpack.c.b16 %v408, %v404
    %v597 = vpack.c.b16 %v413, %v409
    %v598 = vpack.c.b16 %v414, %v410
    %v599 = vpack.c.b16 %v415, %v411
    %v600 = vpack.c.b16 %v416, %v412
    %v601 = vpack.c.b16 %v421, %v417
    %v602 = vpack.c.b16 %v422, %v418
    %v603 = vpack.c.b16 %v423, %v419
    %v604 = vpack.c.b16 %v424, %v420
    %v605 = vpack.c.b16 %v429, %v425
    %v606 = vpack.c.b16 %v430, %v426
    %v607 = vpack.c.b16 %v431, %v427
    %v608 = vpack.c.b16 %v432, %v428
    %v609 = vpack.c.b16 %v437, %v433
    %v610 = vpack.c.b16 %v438, %v434
    %v611 = vpack.c.b16 %v439, %v435
    %v612 = vpack.c.b16 %v440, %v436
    %v613 = vpack.c.b16 %v445, %v441
    %v614 = vpack.c.b16 %v446, %v442
    %v615 = vpack.c.b16 %v447, %v443
    %v616 = vpack.c.b16 %v448, %v444
    %v617 = vpack.c.b16 %v453, %v449
    %v618 = vpack.c.b16 %v454, %v450
    %v619 = vpack.c.b16 %v455, %v451
    %v620 = vpack.c.b16 %v456, %v452
    %v621 = vpack.c.b16 %v461, %v457
    %v622 = vpack.c.b16 %v462, %v458
    %v623 = vpack.c.b16 %v463, %v459
    %v624 = vpack.c.b16 %v464, %v460
    %v625 = vpack.c.b16 %v469, %v465
    %v626 = vpack.c.b16 %v470, %v466
    %v627 = vpack.c.b16 %v471, %v467
    %v628 = vpack.c.b16 %v472, %v468
    %v629 = vpack.c.b16 %v477, %v473
    %v630 = vpack.c.b16 %v478, %v474
    %v631 = vpack.c.b16 %v479, %v475
    %v632 = vpack.c.b16 %v480, %v476
    %v633 = vpack.c.b16 %v485, %v481
    %v634 = vpack.c.b16 %v486, %v482
    %v635 = vpack.c.b16 %v487, %v483
    %v636 = vpack.c.b16 %v488, %v484
    %v637 = vpack.c.b16 %v493, %v489
    %v638 = vpack.c.b16 %v494, %v490
    %v639 = vpack.c.b16 %v495, %v491
    %v640 = vpack.c.b16 %v496, %v492
    %v641 = vpack.c.b16 %v501, %v497
    %v642 = vpack.c.b16 %v502, %v498
    %v643 = vpack.c.b16 %v503, %v499
    %v644 = vpack.c.b16 %v504, %v500
    %v645 = vpack.c.b16 %v509, %v505
    %v646 = vpack.c.b16 %v510, %v506
    %v647 = vpack.c.b16 %v511, %v507
    %v648 = vpack.c.b16 %v512, %v508
    %v649 = vpack.c.b16 %v517, %v513
    %v650 = vpack.c.b16 %v518, %v514
    %v651 = vpack.c.b16 %v519, %v515
    %v652 = vpack.c.b16 %v520, %v516
    %v653 = vpack.c.b16 %v525, %v521
    %v654 = vpack.c.b16 %v526, %v522
    %v655 = vpack.c.b16 %v527, %v523
    %v656 = vpack.c.b16 %v528, %v524
    %v657 = vpack.c.b16 %v533, %v529
    %v658 = vpack.c.b16 %v534, %v530
    %v659 = vpack.c.b16 %v535, %v531
    %v660 = vpack.c.b16 %v536, %v532
    %v661 = vpack.c.b16 %v541, %v537
    %v662 = vpack.c.b16 %v542, %v538
    %v663 = vpack.c.b16 %v543, %v539
    %v664 = vpack.c.b16 %v544, %v540
    %v665 = vpack.c.b16 %v549, %v545
    %v666 = vpack.c.b16 %v550, %v546
    %v667 = vpack.c.b16 %v551, %v547
    %v668 = vpack.c.b16 %v552, %v548
    %v669 = vpack.c.b16 %v557, %v553
    %v670 = vpack.c.b16 %v558, %v554
    %v671 = vpack.c.b16 %v559, %v555
    %v672 = vpack.c.b16 %v560, %v556
    %v673 = vpack.c.b16 %v565, %v561
    %v674 = vpack.c.b16 %v566, %v562
    %v675 = vpack.c.b16 %v567, %v563
    %v676 = vpack.c.b16 %v568, %v564
    %v677 = vpack.c.b16 %v573, %v569
    %v678 = vpack.c.b16 %v574, %v570
    %v679 = vpack.c.b16 %v575, %v571
    %v680 = vpack.c.b16 %v576, %v572
    %v681 = vpack.c.b16 %v581, %v577
    %v682 = vpack.c.b16 %v582, %v578
    %v683 = vpack.c.b16 %v583, %v579
    %v684 = vpack.c.b16 %v584, %v580
    %v685 = vpack.c.b16 %v589, %v585
    %v686 = vpack.c.b16 %v590, %v586
    %v687 = vpack.c.b16 %v591, %v587
    %v688 = vpack.c.b16 %v592, %v588
    %785 = vmatpush.bf16.msra.mxu0 %v621
    %786 = vmatpush.bf16.msra.mxu0 %v617
    %787 = vmatpush.bf16.msra.mxu0 %v613
    %788 = vmatpush.bf16.msra.mxu0 %v609
    %789 = vmatpush.bf16.msra.mxu0 %v605
    %790 = vmatpush.bf16.msra.mxu0 %v601
    %791 = vmatpush.bf16.msra.mxu0 %v597
    %792 = vmatpush.bf16.msra.mxu0 %v593
    %793 = vmatmul.bf16.gmra.mxu0 %v196
    %v794 = vpop.f32.mrf.mxu0
    %v795 = vadd.f32 %v297, %v794
    %v796 = vpop.f32.mrf.mxu0
    %797 = vdwg.mxu0
    %798 = vmatpush.bf16.msra.mxu0 %v653
    %799 = vmatpush.bf16.msra.mxu0 %v649
    %800 = vmatpush.bf16.msra.mxu0 %v645
    %801 = vmatpush.bf16.msra.mxu0 %v641
    %802 = vmatpush.bf16.msra.mxu0 %v637
    %803 = vmatpush.bf16.msra.mxu0 %v633
    %804 = vmatpush.bf16.msra.mxu0 %v629
    %805 = vmatpush.bf16.msra.mxu0 %v625
    %806 = vmatmul.bf16.gmra.mxu0 %v197
    %v807 = vpop.f32.mrf.mxu0
    %v808 = vadd.f32 %v795, %v807
    %v809 = vpop.f32.mrf.mxu0
    %810 = vdwg.mxu0
    %811 = vmatpush.bf16.msra.mxu0 %v685
    %812 = vmatpush.bf16.msra.mxu0 %v681
    %813 = vmatpush.bf16.msra.mxu0 %v677
    %814 = vmatpush.bf16.msra.mxu0 %v673
    %815 = vmatpush.bf16.msra.mxu0 %v669
    %816 = vmatpush.bf16.msra.mxu0 %v665
    %817 = vmatpush.bf16.msra.mxu0 %v661
    %818 = vmatpush.bf16.msra.mxu0 %v657
    %819 = vmatmul.bf16.gmra.mxu0 %v198
    %v820 = vpop.f32.mrf.mxu0
    %v821 = vadd.f32 %v808, %v820
    %v822 = vpop.f32.mrf.mxu0
    %823 = vdwg.mxu0
    %824 = vmatpush.bf16.msra.mxu0 %v622
    %825 = vmatpush.bf16.msra.mxu0 %v618
    %826 = vmatpush.bf16.msra.mxu0 %v614
    %827 = vmatpush.bf16.msra.mxu0 %v610
    %828 = vmatpush.bf16.msra.mxu0 %v606
    %829 = vmatpush.bf16.msra.mxu0 %v602
    %830 = vmatpush.bf16.msra.mxu0 %v598
    %831 = vmatpush.bf16.msra.mxu0 %v594
    %832 = vmatmul.bf16.gmra.mxu0 %v196
    %v833 = vpop.f32.mrf.mxu0
    %v834 = vadd.f32 %v298, %v833
    %v835 = vpop.f32.mrf.mxu0
    %836 = vdwg.mxu0
    %837 = vmatpush.bf16.msra.mxu0 %v654
    %838 = vmatpush.bf16.msra.mxu0 %v650
    %839 = vmatpush.bf16.msra.mxu0 %v646
    %840 = vmatpush.bf16.msra.mxu0 %v642
    %841 = vmatpush.bf16.msra.mxu0 %v638
    %842 = vmatpush.bf16.msra.mxu0 %v634
    %843 = vmatpush.bf16.msra.mxu0 %v630
    %844 = vmatpush.bf16.msra.mxu0 %v626
    %845 = vmatmul.bf16.gmra.mxu0 %v197
    %v846 = vpop.f32.mrf.mxu0
    %v847 = vadd.f32 %v834, %v846
    %v848 = vpop.f32.mrf.mxu0
    %849 = vdwg.mxu0
    %850 = vmatpush.bf16.msra.mxu0 %v686
    %851 = vmatpush.bf16.msra.mxu0 %v682
    %852 = vmatpush.bf16.msra.mxu0 %v678
    %853 = vmatpush.bf16.msra.mxu0 %v674
    %854 = vmatpush.bf16.msra.mxu0 %v670
    %855 = vmatpush.bf16.msra.mxu0 %v666
    %856 = vmatpush.bf16.msra.mxu0 %v662
    %857 = vmatpush.bf16.msra.mxu0 %v658
    %858 = vmatmul.bf16.gmra.mxu0 %v198
    %v859 = vpop.f32.mrf.mxu0
    %v860 = vadd.f32 %v847, %v859
    %v861 = vpop.f32.mrf.mxu0
    %862 = vdwg.mxu0
    %863 = vmatpush.bf16.msra.mxu0 %v623
    %864 = vmatpush.bf16.msra.mxu0 %v619
    %865 = vmatpush.bf16.msra.mxu0 %v615
    %866 = vmatpush.bf16.msra.mxu0 %v611
    %867 = vmatpush.bf16.msra.mxu0 %v607
    %868 = vmatpush.bf16.msra.mxu0 %v603
    %869 = vmatpush.bf16.msra.mxu0 %v599
    %870 = vmatpush.bf16.msra.mxu0 %v595
    %871 = vmatmul.bf16.gmra.mxu0 %v196
    %v872 = vpop.f32.mrf.mxu0
    %v873 = vadd.f32 %v299, %v872
    %v874 = vpop.f32.mrf.mxu0
    %875 = vdwg.mxu0
    %876 = vmatpush.bf16.msra.mxu0 %v655
    %877 = vmatpush.bf16.msra.mxu0 %v651
    %878 = vmatpush.bf16.msra.mxu0 %v647
    %879 = vmatpush.bf16.msra.mxu0 %v643
    %880 = vmatpush.bf16.msra.mxu0 %v639
    %881 = vmatpush.bf16.msra.mxu0 %v635
    %882 = vmatpush.bf16.msra.mxu0 %v631
    %883 = vmatpush.bf16.msra.mxu0 %v627
    %884 = vmatmul.bf16.gmra.mxu0 %v197
    %v885 = vpop.f32.mrf.mxu0
    %v886 = vadd.f32 %v873, %v885
    %v887 = vpop.f32.mrf.mxu0
    %888 = vdwg.mxu0
    %889 = vmatpush.bf16.msra.mxu0 %v687
    %890 = vmatpush.bf16.msra.mxu0 %v683
    %891 = vmatpush.bf16.msra.mxu0 %v679
    %892 = vmatpush.bf16.msra.mxu0 %v675
    %893 = vmatpush.bf16.msra.mxu0 %v671
    %894 = vmatpush.bf16.msra.mxu0 %v667
    %895 = vmatpush.bf16.msra.mxu0 %v663
    %896 = vmatpush.bf16.msra.mxu0 %v659
    %897 = vmatmul.bf16.gmra.mxu0 %v198
    %v898 = vpop.f32.mrf.mxu0
    %v899 = vadd.f32 %v886, %v898
    %v900 = vpop.f32.mrf.mxu0
    %901 = vdwg.mxu0
    %902 = vmatpush.bf16.msra.mxu0 %v624
    %903 = vmatpush.bf16.msra.mxu0 %v620
    %904 = vmatpush.bf16.msra.mxu0 %v616
    %905 = vmatpush.bf16.msra.mxu0 %v612
    %906 = vmatpush.bf16.msra.mxu0 %v608
    %907 = vmatpush.bf16.msra.mxu0 %v604
    %908 = vmatpush.bf16.msra.mxu0 %v600
    %909 = vmatpush.bf16.msra.mxu0 %v596
    %910 = vmatmul.bf16.gmra.mxu0 %v196
    %v911 = vpop.f32.mrf.mxu0
    %v912 = vadd.f32 %v300, %v911
    %v913 = vpop.f32.mrf.mxu0
    %914 = vdwg.mxu0
    %915 = vmatpush.bf16.msra.mxu0 %v656
    %916 = vmatpush.bf16.msra.mxu0 %v652
    %917 = vmatpush.bf16.msra.mxu0 %v648
    %918 = vmatpush.bf16.msra.mxu0 %v644
    %919 = vmatpush.bf16.msra.mxu0 %v640
    %920 = vmatpush.bf16.msra.mxu0 %v636
    %921 = vmatpush.bf16.msra.mxu0 %v632
    %922 = vmatpush.bf16.msra.mxu0 %v628
    %923 = vmatmul.bf16.gmra.mxu0 %v197
    %v924 = vpop.f32.mrf.mxu0
    %v925 = vadd.f32 %v912, %v924
    %v926 = vpop.f32.mrf.mxu0
    %927 = vdwg.mxu0
    %928 = vmatpush.bf16.msra.mxu0 %v688
    %929 = vmatpush.bf16.msra.mxu0 %v684
    %930 = vmatpush.bf16.msra.mxu0 %v680
    %931 = vmatpush.bf16.msra.mxu0 %v676
    %932 = vmatpush.bf16.msra.mxu0 %v672
    %933 = vmatpush.bf16.msra.mxu0 %v668
    %934 = vmatpush.bf16.msra.mxu0 %v664
    %935 = vmatpush.bf16.msra.mxu0 %v660
    %936 = vmatmul.bf16.gmra.mxu0 %v198
    %v937 = vpop.f32.mrf.mxu0
    %v938 = vadd.f32 %v925, %v937
    %v939 = vpop.f32.mrf.mxu0
    %940 = vdwg.mxu0
    %v941 = vmax.f32 %v821, 0.0
    %v942 = vmax.f32 %v860, 0.0
    %v943 = vmax.f32 %v899, 0.0
    %v944 = vmax.f32 %v938, 0.0
    %v945 = vld [vmem:[#allocation10] sm:$0xf]
    %v946 = vunpack.c.l.bf16 %v945
    %v948 = vperm.slane %v946, 0
    %v949 = vperm.slane %v946, 2
    %v950 = vperm.slane %v946, 4
    %v951 = vperm.slane %v946, 6
    %v956 = vperm.slane %v948, 0
    %v957 = vperm.slane %v949, 0
    %v958 = vperm.slane %v950, 0
    %v959 = vperm.slane %v951, 0
    %v960 = vmul.f32 %v941, %v956
    %v961 = vmul.f32 %v942, %v957
    %v962 = vmul.f32 %v943, %v958
    %v963 = vmul.f32 %v944, %v959
    %v964 = vadd.f32 %v960, %v961
    %v965 = vadd.f32 %v964, %v962
    %v966 = vadd.f32 %v965, %v963
    %967 = vadd.xlane.f32.xlu0 %v966
    %v968 = vpop.xlane.xlu0 %967
    %v969 = vld [vmem:[#allocation2] sm:$0x1]
    %v971 = vperm.slane %v969, 0
    %v973 = vadd.f32 %v968, %v971
    %vm974 = vcmask 7168
    %975 = vst.msk [vmem:[%s7] sm:$0xff] %vm974, %v973
    // Predicated region
    $region50: #{tpu_custom_call.1} parent=1 // pred_check
      _
    $region51: #{tpu_custom_call.1} parent=1 // pred_check_branch
      %977 = sbr.rel (0) target = $region53
    $region52: #{tpu_custom_call.1} parent=1 // pred_region
      _
    $region53: #{tpu_custom_call.1} parent=1 // pred_fallthru
      _
    // Predicated region
    $region54: #{tpu_custom_call.1} parent=1 // pred_check
      _
    $region55: #{tpu_custom_call.1} parent=1 // pred_check_branch
      %979 = sbr.rel (0) target = $region57
    $region56: #{tpu_custom_call.1} parent=1 // pred_region
      _
    $region57: #{tpu_custom_call.1} parent=1 // pred_fallthru
      _
    %980 = vsyncpa [#allocation4], 1
    %981 = vsyncpa [#allocation6], 1
    %982 = vsyncpa [#allocation9], 1

</llo_original>
